<compile_context>
chip_gen: v5e
topology: v5e:2x2
jax: 0.10.0
libtpu: 0.0.40
codegen_flags: <defaults>
</compile_context>

<pallas_src>
import functools

import jax
import jax.numpy as jnp
import numpy as np
from jax import lax
from jax.experimental import pallas as pl
from jax.experimental.pallas import tpu as pltpu

EPS = 1e-5


def ur_block_kernel(x_ref,        # (C, HW)       input image, f32
                    s1_ref,       # (C, 1)        folded BN1 scale
                    b1_ref,       # (C, 1)        folded BN1 bias
                    w1_ref,       # (Cm, C)       1x1 conv, BN2 scale folded, bf16
                    b2_ref,       # (Cm, 1)       folded BN2 bias
                    w2_ref,       # (Cm, 9*Cm)    3x3 conv im2col weight, BN3 scale folded, bf16
                    b3_ref,       # (Cm, 1)       folded BN3 bias
                    w3_ref,       # (Co, Cm + C)  fused [w3 | pair_sum] weight, f32
                    mask_ref,     # (9, HW)       3x3 window validity masks, f32
                    o_ref,        # (Co, HW)      output image
                    *, W):
    C, HW = x_ref.shape
    Cm = w1_ref.shape[0]

    x = x_ref[...]                                              # (C, HW) f32

    # --- BN1 + ReLU + 1x1 conv (C -> Cm); BN2 scale pre-folded into w1 ------
    a1 = jnp.maximum(x * s1_ref[...] + b1_ref[...], 0.0)
    t2 = jnp.dot(w1_ref[...], a1.astype(jnp.bfloat16),
                 preferred_element_type=jnp.float32)            # (Cm, HW)
    t2 = jnp.maximum(t2 + b2_ref[...], 0.0)                     # BN2 bias + ReLU

    # --- 3x3 conv (SAME) as a single im2col matmul --------------------------
    # Window (dy, dx) == rotation of the flat spatial axis by
    # s = (dy-1)*W + (dx-1); out-of-image lanes are zeroed by mask_ref.
    # Rotations are static slices of a doubled buffer (XLU lane rotates).
    t2d = jnp.concatenate([t2, t2], axis=1)                     # (Cm, 2*HW)
    wins = []
    for dy in range(3):
        for dx in range(3):
            k = ((dy - 1) * W + (dx - 1)) % HW
            y = t2d[:, k:k + HW]                                # rotate by +s
            if (dy, dx) != (1, 1):                              # center tap needs no mask
                y = y * mask_ref[3 * dy + dx:3 * dy + dx + 1, :]
            wins.append(y)
    im2col = jnp.concatenate(wins, axis=0)                      # (9*Cm, HW)
    t3 = jnp.dot(w2_ref[...], im2col.astype(jnp.bfloat16),
                 preferred_element_type=jnp.float32)            # (Cm, HW)
    t3 = jnp.maximum(t3 + b3_ref[...], 0.0)                     # BN3 bias + ReLU

    # --- fused final 1x1 conv + channel-pair shortcut (one f32 matmul) ------
    z = jnp.concatenate([t3, x], axis=0)                        # (Cm + C, HW)
    o_ref[...] = jnp.dot(w3_ref[...], z,
                         preferred_element_type=jnp.float32).astype(o_ref.dtype)


def ur_block_pallas(x_nchw, s1, b1, w1f, b2, w2f, b3, w3e, mask):
    """x_nchw: (B, C, H, W) float32.  Returns (B, C//2, H, W) float32."""
    B, C, H, W = x_nchw.shape
    HW = H * W
    Co = C // 2
    Cm = Co // 2
    x = x_nchw.reshape(B, C, HW)          # NCHW-native; no transpose

    def const_spec(shape):
        return pl.BlockSpec(shape, lambda b: (0,) * len(shape))

    # TODO(synk): for large H*W (esp. v7x with 64 MiB VMEM) also split the
    # spatial axis into row strips (1-row halo) so more, smaller grid steps
    # pipeline DMA/compute and feed both TensorCores even for tiny B.
    out = pl.pallas_call(
        functools.partial(ur_block_kernel, W=W),
        out_shape=jax.ShapeDtypeStruct((B, Co, HW), jnp.float32),
        grid_spec=pltpu.PrefetchScalarGridSpec(
            num_scalar_prefetch=0,
            grid=(B,),
            in_specs=[
                pl.BlockSpec((pl.Squeezed(), C, HW), lambda b: (b, 0, 0)),
                const_spec((C, 1)), const_spec((C, 1)),
                const_spec((Cm, C)),
                const_spec((Cm, 1)),
                const_spec((Cm, 9 * Cm)),
                const_spec((Cm, 1)),
                const_spec((Co, Cm + C)),
                const_spec((9, HW)),
            ],
            out_specs=pl.BlockSpec((pl.Squeezed(), Co, HW),
                                   lambda b: (b, 0, 0)),
        ),
        compiler_params=pltpu.CompilerParams(
            dimension_semantics=("parallel",),
            vmem_limit_bytes=32 * 1024 * 1024),
    )(x, s1, b1, w1f, b2, w2f, b3, w3e, mask)
    return out.reshape(B, Co, H, W)


# ----------------------------- parameter packing -----------------------------

def fold_bn(g, b, m, v):
    s = g / jnp.sqrt(v + EPS)
    return s, b - m * s


def pack_kernel_params(C, H, W, bn1, w1_t, bn2, w2_t, bn3, w3_t):
    Co = C // 2
    Cm = Co // 2
    HW = H * W

    s1, b1 = fold_bn(*bn1)                     # (C,)
    s2, b2 = fold_bn(*bn2)                     # (Cm,)
    s3, b3 = fold_bn(*bn3)                     # (Cm,)

    # 1x1 conv (C -> Cm), BN2 scale folded into its rows; bf16 MXU operand.
    w1f = (s2[:, None] * w1_t.reshape(Cm, C)).astype(jnp.bfloat16)
    # 3x3 conv repacked for im2col: (Cm, 9*Cm), window index k=3*dy+dx major.
    w2r = jnp.transpose(w2_t, (0, 2, 3, 1)).reshape(Cm, 9 * Cm)
    w2f = (s3[:, None] * w2r).astype(jnp.bfloat16)
    # Final 1x1 conv fused with the channel-pair-sum shortcut (f32, exact).
    pair = (jnp.arange(C)[None, :] // 2
            == jnp.arange(Co)[:, None]).astype(jnp.float32)        # (Co, C)
    w3e = jnp.concatenate([w3_t.reshape(Co, Cm), pair], axis=1)    # (Co, Cm+C)

    # Validity masks for the 9 shifted 3x3 windows (precomputed in the wrapper,
    # no per-grid-step iota/where construction inside the kernel).
    hh, ww = jnp.meshgrid(jnp.arange(H), jnp.arange(W), indexing="ij")
    hh = hh.reshape(HW)
    ww = ww.reshape(HW)
    masks = []
    for dy in range(3):
        for dx in range(3):
            ok = ((hh + dy - 1 >= 0) & (hh + dy - 1 < H) &
                  (ww + dx - 1 >= 0) & (ww + dx - 1 < W))
            masks.append(ok.astype(jnp.float32))
    mask = jnp.stack(masks, axis=0)                                # (9, HW)

    return (s1.reshape(C, 1), b1.reshape(C, 1), w1f,
            b2.reshape(Cm, 1), w2f, b3.reshape(Cm, 1), w3e, mask)


# ------------------------------ reference model ------------------------------

def ref_forward(x, bn1, w1_t, bn2, w2_t, bn3, w3_t):
    """Pure-JAX NCHW reference mirroring the PyTorch module (eval-mode BN)."""
    def bn_relu(t, g, b, m, v):
        s = g / jnp.sqrt(v + EPS)
        t = (t - m[None, :, None, None]) * s[None, :, None, None] \
            + b[None, :, None, None]
        return jnp.maximum(t, 0.0)

    dn = ("NCHW", "OIHW", "NCHW")
    t = bn_relu(x, *bn1)
    t = lax.conv_general_dilated(t, w1_t, (1, 1), "VALID", dimension_numbers=dn)
    t = bn_relu(t, *bn2)
    t = lax.conv_general_dilated(t, w2_t, (1, 1), "SAME", dimension_numbers=dn)
    t = bn_relu(t, *bn3)
    conv = lax.conv_general_dilated(t, w3_t, (1, 1), "VALID", dimension_numbers=dn)
    B, C, H, W = x.shape
    cw = x.reshape(B, C // 2, 2, H, W).sum(2)
    return cw + conv


def make_params(key, C):
    Co = C // 2      # Residual_Block out_channel
    Cm = Co // 2     # bottleneck width
    ks = jax.random.split(key, 12)

    def bn(kg, kb, km, kv, n):
        g = jax.random.uniform(kg, (n,), jnp.float32, 0.5, 1.5)
        b = 0.1 * jax.random.normal(kb, (n,), jnp.float32)
        m = 0.1 * jax.random.normal(km, (n,), jnp.float32)
        v = jax.random.uniform(kv, (n,), jnp.float32, 0.5, 1.5)
        return g, b, m, v

    bn1 = bn(ks[0], ks[1], ks[2], ks[3], C)
    bn2 = bn(ks[4], ks[5], ks[6], ks[7], Cm)
    bn3 = bn(ks[8], ks[9], ks[10], ks[11], Cm)

    kw = jax.random.split(jax.random.fold_in(key, 123), 3)
    w1_t = 0.2 * jax.random.normal(kw[0], (Cm, C, 1, 1), jnp.float32)   # OIHW
    w2_t = 0.2 * jax.random.normal(kw[1], (Cm, Cm, 3, 3), jnp.float32)  # OIHW
    w3_t = 0.2 * jax.random.normal(kw[2], (Co, Cm, 1, 1), jnp.float32)  # OIHW
    return bn1, w1_t, bn2, w2_t, bn3, w3_t


if __name__ == "__main__":
    B, C, H, W = 2, 8, 16, 16     # in_channel must be divisible by 4
    key = jax.random.PRNGKey(0)
    kx, kp = jax.random.split(key)
    x = jax.random.normal(kx, (B, C, H, W), jnp.float32)

    bn1, w1_t, bn2, w2_t, bn3, w3_t = make_params(kp, C)
    params = pack_kernel_params(C, H, W, bn1, w1_t, bn2, w2_t, bn3, w3_t)

    out = ur_block_pallas(x, *params)
    out = jax.block_until_ready(out)

    ref = jax.block_until_ready(ref_forward(x, bn1, w1_t, bn2, w2_t, bn3, w3_t))
    # Interior matmuls use bf16 operands (f32 accumulation) -> slightly looser
    # tolerances than pure f32.
    np.testing.assert_allclose(np.asarray(out), np.asarray(ref),
                               rtol=2e-2, atol=2e-2)
    print("KERNEL_OK")
</pallas_src>

<mosaic_0001>
module attributes {stable_mosaic.version = 11 : i64} {
  func.func @ur_block_kernel(%arg0: i32, %arg1: memref<1x8x256xf32, #tpu.memory_space<vmem>>, %arg2: memref<8x1xf32, #tpu.memory_space<vmem>>, %arg3: memref<8x1xf32, #tpu.memory_space<vmem>>, %arg4: memref<2x8xbf16, #tpu.memory_space<vmem>>, %arg5: memref<2x1xf32, #tpu.memory_space<vmem>>, %arg6: memref<2x18xbf16, #tpu.memory_space<vmem>>, %arg7: memref<2x1xf32, #tpu.memory_space<vmem>>, %arg8: memref<4x10xf32, #tpu.memory_space<vmem>>, %arg9: memref<9x256xf32, #tpu.memory_space<vmem>>, %arg10: memref<1x4x256xf32, #tpu.memory_space<vmem>>) attributes {dimension_semantics = [#tpu.dimension_semantics<parallel>], iteration_bounds = array<i64: 2>, scalar_prefetch = 0 : i64, scratch_operands = 0 : i64, tpu.core_type = #tpu.core_type<tc>, window_params = [{transform_indices = @transform_0, window_bounds = array<i64: 1, 8, 256>}, {pipeline_mode = #tpu.pipeline_mode<synchronous>, transform_indices = @transform_1, window_bounds = array<i64: 8, 1>}, {pipeline_mode = #tpu.pipeline_mode<synchronous>, transform_indices = @transform_2, window_bounds = array<i64: 8, 1>}, {pipeline_mode = #tpu.pipeline_mode<synchronous>, transform_indices = @transform_3, window_bounds = array<i64: 2, 8>}, {pipeline_mode = #tpu.pipeline_mode<synchronous>, transform_indices = @transform_4, window_bounds = array<i64: 2, 1>}, {pipeline_mode = #tpu.pipeline_mode<synchronous>, transform_indices = @transform_5, window_bounds = array<i64: 2, 18>}, {pipeline_mode = #tpu.pipeline_mode<synchronous>, transform_indices = @transform_6, window_bounds = array<i64: 2, 1>}, {pipeline_mode = #tpu.pipeline_mode<synchronous>, transform_indices = @transform_7, window_bounds = array<i64: 4, 10>}, {pipeline_mode = #tpu.pipeline_mode<synchronous>, transform_indices = @transform_8, window_bounds = array<i64: 9, 256>}, {transform_indices = @transform_9, window_bounds = array<i64: 1, 4, 256>}]} {
    %c0 = arith.constant 0 : index
    %c0_0 = arith.constant 0 : index
    %c0_1 = arith.constant 0 : index
    %0 = vector.load %arg1[%c0, %c0_0, %c0_1] : memref<1x8x256xf32, #tpu.memory_space<vmem>>, vector<1x8x256xf32>
    %1 = vector.shape_cast %0 : vector<1x8x256xf32> to vector<8x256xf32>
    %c0_2 = arith.constant 0 : index
    %c0_3 = arith.constant 0 : index
    %2 = vector.load %arg2[%c0_2, %c0_3] : memref<8x1xf32, #tpu.memory_space<vmem>>, vector<8x1xf32>
    %3 = vector.broadcast %2 : vector<8x1xf32> to vector<8x256xf32>
    %4 = arith.mulf %1, %3 : vector<8x256xf32>
    %c0_4 = arith.constant 0 : index
    %c0_5 = arith.constant 0 : index
    %5 = vector.load %arg3[%c0_4, %c0_5] : memref<8x1xf32, #tpu.memory_space<vmem>>, vector<8x1xf32>
    %6 = vector.broadcast %5 : vector<8x1xf32> to vector<8x256xf32>
    %7 = arith.addf %4, %6 : vector<8x256xf32>
    %cst = arith.constant 0.000000e+00 : f32
    %8 = vector.broadcast %cst : f32 to vector<8x256xf32>
    %9 = arith.maximumf %7, %8 : vector<8x256xf32>
    %c0_6 = arith.constant 0 : index
    %c0_7 = arith.constant 0 : index
    %10 = vector.load %arg4[%c0_6, %c0_7] : memref<2x8xbf16, #tpu.memory_space<vmem>>, vector<2x8xbf16>
    %11 = arith.truncf %9 : vector<8x256xf32> to vector<8x256xbf16>
    %cst_8 = arith.constant dense<0.000000e+00> : vector<2x256xf32>
    %12 = tpu.matmul %10, %11, %cst_8 {dimension_numbers = #tpu.dot_dimension_numbers<[1], [0], [0], [1], [0, 0, 1, 1], [], []>} : vector<2x8xbf16>, vector<8x256xbf16>, vector<2x256xf32> -> vector<2x256xf32>
    %c0_9 = arith.constant 0 : index
    %c0_10 = arith.constant 0 : index
    %13 = vector.load %arg5[%c0_9, %c0_10] : memref<2x1xf32, #tpu.memory_space<vmem>>, vector<2x1xf32>
    %14 = vector.broadcast %13 : vector<2x1xf32> to vector<2x256xf32>
    %15 = arith.addf %12, %14 : vector<2x256xf32>
    %cst_11 = arith.constant 0.000000e+00 : f32
    %16 = vector.broadcast %cst_11 : f32 to vector<2x256xf32>
    %17 = arith.maximumf %15, %16 : vector<2x256xf32>
    %18 = tpu.concatenate %17, %17 in 1 : vector<2x256xf32>, vector<2x256xf32> -> vector<2x512xf32>
    %19 = vector.extract_strided_slice %18 {offsets = [0, 239], sizes = [2, 256], strides = [1, 1]} : vector<2x512xf32> to vector<2x256xf32>
    %c0_12 = arith.constant 0 : index
    %c0_13 = arith.constant 0 : index
    %20 = vector.load %arg9[%c0_12, %c0_13] : memref<9x256xf32, #tpu.memory_space<vmem>>, vector<1x256xf32>
    %21 = vector.broadcast %20 : vector<1x256xf32> to vector<2x256xf32>
    %22 = arith.mulf %19, %21 : vector<2x256xf32>
    %23 = vector.extract_strided_slice %18 {offsets = [0, 240], sizes = [2, 256], strides = [1, 1]} : vector<2x512xf32> to vector<2x256xf32>
    %c1 = arith.constant 1 : index
    %c0_14 = arith.constant 0 : index
    %24 = vector.load %arg9[%c1, %c0_14] : memref<9x256xf32, #tpu.memory_space<vmem>>, vector<1x256xf32>
    %25 = vector.broadcast %24 : vector<1x256xf32> to vector<2x256xf32>
    %26 = arith.mulf %23, %25 : vector<2x256xf32>
    %27 = vector.extract_strided_slice %18 {offsets = [0, 241], sizes = [2, 256], strides = [1, 1]} : vector<2x512xf32> to vector<2x256xf32>
    %c2 = arith.constant 2 : index
    %c0_15 = arith.constant 0 : index
    %28 = vector.load %arg9[%c2, %c0_15] : memref<9x256xf32, #tpu.memory_space<vmem>>, vector<1x256xf32>
    %29 = vector.broadcast %28 : vector<1x256xf32> to vector<2x256xf32>
    %30 = arith.mulf %27, %29 : vector<2x256xf32>
    %31 = vector.extract_strided_slice %18 {offsets = [0, 255], sizes = [2, 256], strides = [1, 1]} : vector<2x512xf32> to vector<2x256xf32>
    %c3 = arith.constant 3 : index
    %c0_16 = arith.constant 0 : index
    %32 = vector.load %arg9[%c3, %c0_16] : memref<9x256xf32, #tpu.memory_space<vmem>>, vector<1x256xf32>
    %33 = vector.broadcast %32 : vector<1x256xf32> to vector<2x256xf32>
    %34 = arith.mulf %31, %33 : vector<2x256xf32>
    %35 = vector.extract_strided_slice %18 {offsets = [0, 0], sizes = [2, 256], strides = [1, 1]} : vector<2x512xf32> to vector<2x256xf32>
    %36 = vector.extract_strided_slice %18 {offsets = [0, 1], sizes = [2, 256], strides = [1, 1]} : vector<2x512xf32> to vector<2x256xf32>
    %c5 = arith.constant 5 : index
    %c0_17 = arith.constant 0 : index
    %37 = vector.load %arg9[%c5, %c0_17] : memref<9x256xf32, #tpu.memory_space<vmem>>, vector<1x256xf32>
    %38 = vector.broadcast %37 : vector<1x256xf32> to vector<2x256xf32>
    %39 = arith.mulf %36, %38 : vector<2x256xf32>
    %40 = vector.extract_strided_slice %18 {offsets = [0, 15], sizes = [2, 256], strides = [1, 1]} : vector<2x512xf32> to vector<2x256xf32>
    %c6 = arith.constant 6 : index
    %c0_18 = arith.constant 0 : index
    %41 = vector.load %arg9[%c6, %c0_18] : memref<9x256xf32, #tpu.memory_space<vmem>>, vector<1x256xf32>
    %42 = vector.broadcast %41 : vector<1x256xf32> to vector<2x256xf32>
    %43 = arith.mulf %40, %42 : vector<2x256xf32>
    %44 = vector.extract_strided_slice %18 {offsets = [0, 16], sizes = [2, 256], strides = [1, 1]} : vector<2x512xf32> to vector<2x256xf32>
    %c7 = arith.constant 7 : index
    %c0_19 = arith.constant 0 : index
    %45 = vector.load %arg9[%c7, %c0_19] : memref<9x256xf32, #tpu.memory_space<vmem>>, vector<1x256xf32>
    %46 = vector.broadcast %45 : vector<1x256xf32> to vector<2x256xf32>
    %47 = arith.mulf %44, %46 : vector<2x256xf32>
    %48 = vector.extract_strided_slice %18 {offsets = [0, 17], sizes = [2, 256], strides = [1, 1]} : vector<2x512xf32> to vector<2x256xf32>
    %c8 = arith.constant 8 : index
    %c0_20 = arith.constant 0 : index
    %49 = vector.load %arg9[%c8, %c0_20] : memref<9x256xf32, #tpu.memory_space<vmem>>, vector<1x256xf32>
    %50 = vector.broadcast %49 : vector<1x256xf32> to vector<2x256xf32>
    %51 = arith.mulf %48, %50 : vector<2x256xf32>
    %52 = tpu.concatenate %22, %26, %30, %34, %35, %39, %43, %47, %51 in 0 : vector<2x256xf32>, vector<2x256xf32>, vector<2x256xf32>, vector<2x256xf32>, vector<2x256xf32>, vector<2x256xf32>, vector<2x256xf32>, vector<2x256xf32>, vector<2x256xf32> -> vector<18x256xf32>
    %c0_21 = arith.constant 0 : index
    %c0_22 = arith.constant 0 : index
    %53 = vector.load %arg6[%c0_21, %c0_22] : memref<2x18xbf16, #tpu.memory_space<vmem>>, vector<2x18xbf16>
    %54 = arith.truncf %52 : vector<18x256xf32> to vector<18x256xbf16>
    %cst_23 = arith.constant dense<0.000000e+00> : vector<2x256xf32>
    %55 = tpu.matmul %53, %54, %cst_23 {dimension_numbers = #tpu.dot_dimension_numbers<[1], [0], [0], [1], [0, 0, 1, 1], [], []>} : vector<2x18xbf16>, vector<18x256xbf16>, vector<2x256xf32> -> vector<2x256xf32>
    %c0_24 = arith.constant 0 : index
    %c0_25 = arith.constant 0 : index
    %56 = vector.load %arg7[%c0_24, %c0_25] : memref<2x1xf32, #tpu.memory_space<vmem>>, vector<2x1xf32>
    %57 = vector.broadcast %56 : vector<2x1xf32> to vector<2x256xf32>
    %58 = arith.addf %55, %57 : vector<2x256xf32>
    %cst_26 = arith.constant 0.000000e+00 : f32
    %59 = vector.broadcast %cst_26 : f32 to vector<2x256xf32>
    %60 = arith.maximumf %58, %59 : vector<2x256xf32>
    %61 = tpu.concatenate %60, %1 in 0 : vector<2x256xf32>, vector<8x256xf32> -> vector<10x256xf32>
    %c0_27 = arith.constant 0 : index
    %c0_28 = arith.constant 0 : index
    %62 = vector.load %arg8[%c0_27, %c0_28] : memref<4x10xf32, #tpu.memory_space<vmem>>, vector<4x10xf32>
    %cst_29 = arith.constant dense<0.000000e+00> : vector<4x256xf32>
    %63 = tpu.matmul %62, %61, %cst_29 {dimension_numbers = #tpu.dot_dimension_numbers<[1], [0], [0], [1], [0, 0, 1, 1], [], []>} : vector<4x10xf32>, vector<10x256xf32>, vector<4x256xf32> -> vector<4x256xf32>
    %c0_30 = arith.constant 0 : index
    %c0_31 = arith.constant 0 : index
    %c0_32 = arith.constant 0 : index
    %64 = vector.load %arg10[%c0_30, %c0_31, %c0_32] : memref<1x4x256xf32, #tpu.memory_space<vmem>>, vector<1x4x256xf32>
    %65 = vector.shape_cast %64 : vector<1x4x256xf32> to vector<4x256xf32>
    %66 = vector.shape_cast %63 : vector<4x256xf32> to vector<1x4x256xf32>
    tpu.vector_store %arg10[%c0_30, %c0_31, %c0_32], %66 {strides = array<i32>} : memref<1x4x256xf32, #tpu.memory_space<vmem>>, vector<1x4x256xf32>,
    return
  }
  func.func @transform_0(%arg0: i32) -> (i32, i32, i32) {
    %c0_i32 = arith.constant 0 : i32
    %c0_i32_0 = arith.constant 0 : i32
    %c0_i32_1 = arith.constant 0 : i32
    return %arg0, %c0_i32, %c0_i32_0 : i32, i32, i32
  }
  func.func @transform_1(%arg0: i32) -> (i32, i32) {
    %c0_i32 = arith.constant 0 : i32
    %c0_i32_0 = arith.constant 0 : i32
    %c0_i32_1 = arith.constant 0 : i32
    return %c0_i32, %c0_i32_0 : i32, i32
  }
  func.func @transform_2(%arg0: i32) -> (i32, i32) {
    %c0_i32 = arith.constant 0 : i32
    %c0_i32_0 = arith.constant 0 : i32
    %c0_i32_1 = arith.constant 0 : i32
    return %c0_i32, %c0_i32_0 : i32, i32
  }
  func.func @transform_3(%arg0: i32) -> (i32, i32) {
    %c0_i32 = arith.constant 0 : i32
    %c0_i32_0 = arith.constant 0 : i32
    %c0_i32_1 = arith.constant 0 : i32
    return %c0_i32, %c0_i32_0 : i32, i32
  }
  func.func @transform_4(%arg0: i32) -> (i32, i32) {
    %c0_i32 = arith.constant 0 : i32
    %c0_i32_0 = arith.constant 0 : i32
    %c0_i32_1 = arith.constant 0 : i32
    return %c0_i32, %c0_i32_0 : i32, i32
  }
  func.func @transform_5(%arg0: i32) -> (i32, i32) {
    %c0_i32 = arith.constant 0 : i32
    %c0_i32_0 = arith.constant 0 : i32
    %c0_i32_1 = arith.constant 0 : i32
    return %c0_i32, %c0_i32_0 : i32, i32
  }
  func.func @transform_6(%arg0: i32) -> (i32, i32) {
    %c0_i32 = arith.constant 0 : i32
    %c0_i32_0 = arith.constant 0 : i32
    %c0_i32_1 = arith.constant 0 : i32
    return %c0_i32, %c0_i32_0 : i32, i32
  }
  func.func @transform_7(%arg0: i32) -> (i32, i32) {
    %c0_i32 = arith.constant 0 : i32
    %c0_i32_0 = arith.constant 0 : i32
    %c0_i32_1 = arith.constant 0 : i32
    return %c0_i32, %c0_i32_0 : i32, i32
  }
  func.func @transform_8(%arg0: i32) -> (i32, i32) {
    %c0_i32 = arith.constant 0 : i32
    %c0_i32_0 = arith.constant 0 : i32
    %c0_i32_1 = arith.constant 0 : i32
    return %c0_i32, %c0_i32_0 : i32, i32
  }
  func.func @transform_9(%arg0: i32) -> (i32, i32, i32) {
    %c0_i32 = arith.constant 0 : i32
    %c0_i32_0 = arith.constant 0 : i32
    %c0_i32_1 = arith.constant 0 : i32
    return %arg0, %c0_i32, %c0_i32_0 : i32, i32, i32
  }
}

</mosaic_0001>

<llo_original>
// kernel: tpu_custom_call.1
$region0: #{tpu_custom_call.1}
  #allocation0 [shape = 'u32[]', space=smem, size = 0x4, offset = 0x4, fixed_abs, tag = 'smem constant byte address 0x4 - core index']
  #allocation1 [shape = 'u32[72,128]{1,0:T(1,128)}', space=vmem, size = 0x9000, scoped, tag = 'internal scratch']
  %s0 = inlined_call_operand.hbm [shape: f32[2,8,256], index: 0, kind: input, shape index: {}]
  %s1 = inlined_call_operand.vmem [shape: f32[8,1], index: 1, kind: input, shape index: {}]
  %s2 = inlined_call_operand.vmem [shape: f32[8,1], index: 2, kind: input, shape index: {}]
  %s3 = inlined_call_operand.vmem [shape: bf16[2,8], index: 3, kind: input, shape index: {}]
  %s4 = inlined_call_operand.vmem [shape: f32[2,1], index: 4, kind: input, shape index: {}]
  %s5 = inlined_call_operand.vmem [shape: bf16[2,18], index: 5, kind: input, shape index: {}]
  %s6 = inlined_call_operand.vmem [shape: f32[2,1], index: 6, kind: input, shape index: {}]
  %s7 = inlined_call_operand.vmem [shape: f32[4,10], index: 7, kind: input, shape index: {}]
  %s8 = inlined_call_operand.hbm [shape: f32[9,256], index: 8, kind: input, shape index: {}]
  %s9 = inlined_call_operand.hbm [shape: f32[2,4,256], index: 9, kind: output, shape index: {}]
  %s10 = sld [smem:[#allocation0]]
  $region77: #{tpu_custom_call.1} parent=0
    _
  %s12 = ssub.s32 1, %s10
  %s13 = scalar_select 0, %s12, %s10
  $region1: #{tpu_custom_call.1} parent=0
    #allocation2 [shape = 'u8[16384]{0}', space=vmem, size = 0x4000, scoped, tag = 'input window, operand 0']
    #allocation3 [shape = 's32[2]{0}', space=sflag, size = 0x8, scoped, tag = 'scoped memory for tpu_custom_call.1']
    #allocation4 [shape = 's32[2]{0}', space=sflag, size = 0x8, scoped, tag = 'scoped memory for tpu_custom_call.1']
    #allocation5 [shape = 'u8[16384]{0}', space=vmem, size = 0x4000, scoped, tag = 'input window, operand 8, single buffered']
    #allocation6 [shape = 's32[1]{0}', space=sflag, size = 0x4, scoped, tag = 'scoped memory for tpu_custom_call.1']
    #allocation7 [shape = 'u8[8192]{0}', space=vmem, size = 0x2000, scoped, tag = 'output window, operand 0']
    %14 = vsyncpa [#allocation3], 0
    %s15 = scalar_lea.sflag [#allocation3], 1
    %16 = vsyncpa %s15, 0
    %17 = vsyncpa [#allocation6], 0
    %18 = vsyncpa [#allocation4], 0
    %s19 = scalar_lea.sflag [#allocation4], 1
    %20 = vsyncpa %s19, 0
    loop: start=0, step=1, limit=4
    $region2: #{tpu_custom_call.1} parent=1 // loop_pre_header
      _
    $region3: #{tpu_custom_call.1} parent=1 // loop_header
      %s22 = sphi 0, %s26
      %p23 = scmp.ge.s32.totalorder %s22, 4
      %s32 = sphi 0, %s34
      %s35 = sphi 0, %s32
      %s36 = sphi 0, %s35
      %s52 = sphi 0, %s36
      %s56 = sphi 0, %s56
      %s58 = sphi 0, %s56
      %s59 = sphi 0, %s58
      %s73 = sphi 0, %s59
      %s77 = sphi 0, %s77
      %s79 = sphi 0, %s77
      %s80 = sphi 0, %s79
      %s94 = sphi 0, %s80
      %s98 = sphi 0, %s98
      %s100 = sphi 0, %s98
      %s101 = sphi 0, %s100
      %s115 = sphi 0, %s101
      %s119 = sphi 0, %s119
      %s121 = sphi 0, %s119
      %s122 = sphi 0, %s121
      %s136 = sphi 0, %s122
      %s140 = sphi 0, %s140
      %s142 = sphi 0, %s140
      %s143 = sphi 0, %s142
      %s157 = sphi 0, %s143
      %s161 = sphi 0, %s161
      %s163 = sphi 0, %s161
      %s164 = sphi 0, %s163
      %s178 = sphi 0, %s164
      %s182 = sphi 0, %s182
      %s184 = sphi 0, %s182
      %s185 = sphi 0, %s184
      %s199 = sphi 0, %s185
      %s203 = sphi 0, %s203
      %s205 = sphi 0, %s203
      %s206 = sphi 0, %s205
      %s220 = sphi 0, %s206
      %s226 = sphi 0, %s228
      %s229 = sphi 0, %s226
      %s230 = sphi 0, %s229
      %s246 = sphi 0, %s230
    $region4: #{tpu_custom_call.1} parent=1 // loop_header_branch
      %25 = sbr.rel (%p23) target = $region8
    $region5: #{tpu_custom_call.1} parent=1 // loop_body
      %s27 = ssub.s32 %s22, 1
      %s28 = ssub.s32 %s22, 2
      %s29 = sadd.s32 %s22, 1
      %s30 = ssub.s32 %s22, %s29
      %p31 = scmp.eq.s32.totalorder %s30, 0
      %s33 = sadd.s32 %s32, 1
      %s34 = scalar_select %p31, %s32, %s33
      %p37 = pneg %p31
      %p38 = scmp.eq.s32.totalorder %s22, 1
      %p39 = por %p37, %p38
      %p40 = scmp.ne.s32.totalorder %s32, %s35
      %p41 = scmp.eq.s32.totalorder %s22, 0
      %p42 = por %p40, %p41
      %p43 = scmp.ne.s32.totalorder %s32, %s35
      %p44 = scmp.eq.s32.totalorder %s27, 1
      %p45 = por %p43, %p44
      %p46 = scmp.ne.s32.totalorder %s35, %s36
      %p47 = scmp.eq.s32.totalorder %s27, 0
      %p48 = por %p46, %p47
      %p49 = scmp.ne.s32.totalorder %s35, %s36
      %p50 = scmp.eq.s32.totalorder %s28, 1
      %p51 = por %p49, %p50
      %p53 = scmp.ne.s32.totalorder %s36, %s52
      %p54 = scmp.eq.s32.totalorder %s28, 0
      %p55 = por %p53, %p54
      %s57 = sadd.s32 %s56, 1
      %p60 = scmp.eq.s32.totalorder %s22, 1
      %p61 = scmp.ne.s32.totalorder %s56, %s58
      %p62 = scmp.eq.s32.totalorder %s22, 0
      %p63 = por %p61, %p62
      %p64 = scmp.ne.s32.totalorder %s56, %s58
      %p65 = scmp.eq.s32.totalorder %s27, 1
      %p66 = por %p64, %p65
      %p67 = scmp.ne.s32.totalorder %s58, %s59
      %p68 = scmp.eq.s32.totalorder %s27, 0
      %p69 = por %p67, %p68
      %p70 = scmp.ne.s32.totalorder %s58, %s59
      %p71 = scmp.eq.s32.totalorder %s28, 1
      %p72 = por %p70, %p71
      %p74 = scmp.ne.s32.totalorder %s59, %s73
      %p75 = scmp.eq.s32.totalorder %s28, 0
      %p76 = por %p74, %p75
      %s78 = sadd.s32 %s77, 1
      %p81 = scmp.eq.s32.totalorder %s22, 1
      %p82 = scmp.ne.s32.totalorder %s77, %s79
      %p83 = scmp.eq.s32.totalorder %s22, 0
      %p84 = por %p82, %p83
      %p85 = scmp.ne.s32.totalorder %s77, %s79
      %p86 = scmp.eq.s32.totalorder %s27, 1
      %p87 = por %p85, %p86
      %p88 = scmp.ne.s32.totalorder %s79, %s80
      %p89 = scmp.eq.s32.totalorder %s27, 0
      %p90 = por %p88, %p89
      %p91 = scmp.ne.s32.totalorder %s79, %s80
      %p92 = scmp.eq.s32.totalorder %s28, 1
      %p93 = por %p91, %p92
      %p95 = scmp.ne.s32.totalorder %s80, %s94
      %p96 = scmp.eq.s32.totalorder %s28, 0
      %p97 = por %p95, %p96
      %s99 = sadd.s32 %s98, 1
      %p102 = scmp.eq.s32.totalorder %s22, 1
      %p103 = scmp.ne.s32.totalorder %s98, %s100
      %p104 = scmp.eq.s32.totalorder %s22, 0
      %p105 = por %p103, %p104
      %p106 = scmp.ne.s32.totalorder %s98, %s100
      %p107 = scmp.eq.s32.totalorder %s27, 1
      %p108 = por %p106, %p107
      %p109 = scmp.ne.s32.totalorder %s100, %s101
      %p110 = scmp.eq.s32.totalorder %s27, 0
      %p111 = por %p109, %p110
      %p112 = scmp.ne.s32.totalorder %s100, %s101
      %p113 = scmp.eq.s32.totalorder %s28, 1
      %p114 = por %p112, %p113
      %p116 = scmp.ne.s32.totalorder %s101, %s115
      %p117 = scmp.eq.s32.totalorder %s28, 0
      %p118 = por %p116, %p117
      %s120 = sadd.s32 %s119, 1
      %p123 = scmp.eq.s32.totalorder %s22, 1
      %p124 = scmp.ne.s32.totalorder %s119, %s121
      %p125 = scmp.eq.s32.totalorder %s22, 0
      %p126 = por %p124, %p125
      %p127 = scmp.ne.s32.totalorder %s119, %s121
      %p128 = scmp.eq.s32.totalorder %s27, 1
      %p129 = por %p127, %p128
      %p130 = scmp.ne.s32.totalorder %s121, %s122
      %p131 = scmp.eq.s32.totalorder %s27, 0
      %p132 = por %p130, %p131
      %p133 = scmp.ne.s32.totalorder %s121, %s122
      %p134 = scmp.eq.s32.totalorder %s28, 1
      %p135 = por %p133, %p134
      %p137 = scmp.ne.s32.totalorder %s122, %s136
      %p138 = scmp.eq.s32.totalorder %s28, 0
      %p139 = por %p137, %p138
      %s141 = sadd.s32 %s140, 1
      %p144 = scmp.eq.s32.totalorder %s22, 1
      %p145 = scmp.ne.s32.totalorder %s140, %s142
      %p146 = scmp.eq.s32.totalorder %s22, 0
      %p147 = por %p145, %p146
      %p148 = scmp.ne.s32.totalorder %s140, %s142
      %p149 = scmp.eq.s32.totalorder %s27, 1
      %p150 = por %p148, %p149
      %p151 = scmp.ne.s32.totalorder %s142, %s143
      %p152 = scmp.eq.s32.totalorder %s27, 0
      %p153 = por %p151, %p152
      %p154 = scmp.ne.s32.totalorder %s142, %s143
      %p155 = scmp.eq.s32.totalorder %s28, 1
      %p156 = por %p154, %p155
      %p158 = scmp.ne.s32.totalorder %s143, %s157
      %p159 = scmp.eq.s32.totalorder %s28, 0
      %p160 = por %p158, %p159
      %s162 = sadd.s32 %s161, 1
      %p165 = scmp.eq.s32.totalorder %s22, 1
      %p166 = scmp.ne.s32.totalorder %s161, %s163
      %p167 = scmp.eq.s32.totalorder %s22, 0
      %p168 = por %p166, %p167
      %p169 = scmp.ne.s32.totalorder %s161, %s163
      %p170 = scmp.eq.s32.totalorder %s27, 1
      %p171 = por %p169, %p170
      %p172 = scmp.ne.s32.totalorder %s163, %s164
      %p173 = scmp.eq.s32.totalorder %s27, 0
      %p174 = por %p172, %p173
      %p175 = scmp.ne.s32.totalorder %s163, %s164
      %p176 = scmp.eq.s32.totalorder %s28, 1
      %p177 = por %p175, %p176
      %p179 = scmp.ne.s32.totalorder %s164, %s178
      %p180 = scmp.eq.s32.totalorder %s28, 0
      %p181 = por %p179, %p180
      %s183 = sadd.s32 %s182, 1
      %p186 = scmp.eq.s32.totalorder %s22, 1
      %p187 = scmp.ne.s32.totalorder %s182, %s184
      %p188 = scmp.eq.s32.totalorder %s22, 0
      %p189 = por %p187, %p188
      %p190 = scmp.ne.s32.totalorder %s182, %s184
      %p191 = scmp.eq.s32.totalorder %s27, 1
      %p192 = por %p190, %p191
      %p193 = scmp.ne.s32.totalorder %s184, %s185
      %p194 = scmp.eq.s32.totalorder %s27, 0
      %p195 = por %p193, %p194
      %p196 = scmp.ne.s32.totalorder %s184, %s185
      %p197 = scmp.eq.s32.totalorder %s28, 1
      %p198 = por %p196, %p197
      %p200 = scmp.ne.s32.totalorder %s185, %s199
      %p201 = scmp.eq.s32.totalorder %s28, 0
      %p202 = por %p200, %p201
      %s204 = sadd.s32 %s203, 1
      %p207 = scmp.eq.s32.totalorder %s22, 1
      %p208 = scmp.ne.s32.totalorder %s203, %s205
      %p209 = scmp.eq.s32.totalorder %s22, 0
      %p210 = por %p208, %p209
      %p211 = scmp.ne.s32.totalorder %s203, %s205
      %p212 = scmp.eq.s32.totalorder %s27, 1
      %p213 = por %p211, %p212
      %p214 = scmp.ne.s32.totalorder %s205, %s206
      %p215 = scmp.eq.s32.totalorder %s27, 0
      %p216 = por %p214, %p215
      %p217 = scmp.ne.s32.totalorder %s205, %s206
      %p218 = scmp.eq.s32.totalorder %s28, 1
      %p219 = por %p217, %p218
      %p221 = scmp.ne.s32.totalorder %s206, %s220
      %p222 = scmp.eq.s32.totalorder %s28, 0
      %p223 = por %p221, %p222
      %s224 = ssub.s32 %s22, %s29
      %p225 = scmp.eq.s32.totalorder %s224, 0
      %s227 = sadd.s32 %s226, 1
      %s228 = scalar_select %p225, %s226, %s227
      %p231 = pneg %p225
      %p232 = scmp.eq.s32.totalorder %s22, 1
      %p233 = por %p231, %p232
      %p234 = scmp.ne.s32.totalorder %s226, %s229
      %p235 = scmp.eq.s32.totalorder %s22, 0
      %p236 = por %p234, %p235
      %p237 = scmp.ne.s32.totalorder %s226, %s229
      %p238 = scmp.eq.s32.totalorder %s27, 1
      %p239 = por %p237, %p238
      %p240 = scmp.ne.s32.totalorder %s229, %s230
      %p241 = scmp.eq.s32.totalorder %s27, 0
      %p242 = por %p240, %p241
      %p243 = scmp.ne.s32.totalorder %s229, %s230
      %p244 = scmp.eq.s32.totalorder %s28, 1
      %p245 = por %p243, %p244
      %p247 = scmp.ne.s32.totalorder %s230, %s246
      %p248 = scmp.eq.s32.totalorder %s28, 0
      %p249 = por %p247, %p248
      %p250 = scmp.le.s32.totalorder 1, %s22
      %p251 = scmp.lt.s32.totalorder %s22, 3
      %p252 = pnand %p250, %p251
      %p253 = pneg %p252
      // Predicated region
      $region9: #{tpu_custom_call.1} parent=5 // pred_check
        _
      $region10: #{tpu_custom_call.1} parent=5 // pred_check_branch
        %255 = sbr.rel (%p252) target = $region12
      $region11: #{tpu_custom_call.1} parent=5 // pred_region
        %s256 = ssub.s32 %s22, 1
        // Predicated region
        $region13: #{tpu_custom_call.1} parent=11 // pred_check
          %p257 = pneg %p69
        $region14: #{tpu_custom_call.1} parent=11 // pred_check_branch
          %259 = sbr.rel (%p257) target = $region16
        $region15: #{tpu_custom_call.1} parent=11 // pred_region
          _
        $region16: #{tpu_custom_call.1} parent=11 // pred_fallthru
          _
        // Predicated region
        $region17: #{tpu_custom_call.1} parent=11 // pred_check
          %p260 = pneg %p90
        $region18: #{tpu_custom_call.1} parent=11 // pred_check_branch
          %262 = sbr.rel (%p260) target = $region20
        $region19: #{tpu_custom_call.1} parent=11 // pred_region
          _
        $region20: #{tpu_custom_call.1} parent=11 // pred_fallthru
          _
        // Predicated region
        $region21: #{tpu_custom_call.1} parent=11 // pred_check
          %p263 = pneg %p111
        $region22: #{tpu_custom_call.1} parent=11 // pred_check_branch
          %265 = sbr.rel (%p263) target = $region24
        $region23: #{tpu_custom_call.1} parent=11 // pred_region
          _
        $region24: #{tpu_custom_call.1} parent=11 // pred_fallthru
          _
        // Predicated region
        $region25: #{tpu_custom_call.1} parent=11 // pred_check
          %p266 = pneg %p132
        $region26: #{tpu_custom_call.1} parent=11 // pred_check_branch
          %268 = sbr.rel (%p266) target = $region28
        $region27: #{tpu_custom_call.1} parent=11 // pred_region
          _
        $region28: #{tpu_custom_call.1} parent=11 // pred_fallthru
          _
        // Predicated region
        $region29: #{tpu_custom_call.1} parent=11 // pred_check
          %p269 = pneg %p153
        $region30: #{tpu_custom_call.1} parent=11 // pred_check_branch
          %271 = sbr.rel (%p269) target = $region32
        $region31: #{tpu_custom_call.1} parent=11 // pred_region
          _
        $region32: #{tpu_custom_call.1} parent=11 // pred_fallthru
          _
        // Predicated region
        $region33: #{tpu_custom_call.1} parent=11 // pred_check
          %p272 = pneg %p174
        $region34: #{tpu_custom_call.1} parent=11 // pred_check_branch
          %274 = sbr.rel (%p272) target = $region36
        $region35: #{tpu_custom_call.1} parent=11 // pred_region
          _
        $region36: #{tpu_custom_call.1} parent=11 // pred_fallthru
          _
        // Predicated region
        $region37: #{tpu_custom_call.1} parent=11 // pred_check
          %p275 = pneg %p195
        $region38: #{tpu_custom_call.1} parent=11 // pred_check_branch
          %277 = sbr.rel (%p275) target = $region40
        $region39: #{tpu_custom_call.1} parent=11 // pred_region
          _
        $region40: #{tpu_custom_call.1} parent=11 // pred_fallthru
          _
        // Predicated region
        $region41: #{tpu_custom_call.1} parent=11 // pred_check
          %p278 = pneg %p216
        $region42: #{tpu_custom_call.1} parent=11 // pred_check_branch
          %280 = sbr.rel (%p278) target = $region44
        $region43: #{tpu_custom_call.1} parent=11 // pred_region
          %282 = vsyncadd [#allocation6], 0
          %s283 = sshll.u32 %s8, 4
          %s284 = int_to_ptr.hbm [resolvable:$true] %s283
          %s285 = sshll.u32 [#allocation5], 4
          %s286 = int_to_ptr.vmem [resolvable:$true] %s285
          %291 = dma.hbm_to_vmem [thread:$0]  %s284, 512, %s286, [#allocation6], 256, 256, 16
        $region44: #{tpu_custom_call.1} parent=11 // pred_fallthru
          _
      $region12: #{tpu_custom_call.1} parent=5 // pred_fallthru
        _
      %p292 = scmp.lt.s32.totalorder %s22, 2
      // Predicated region
      $region45: #{tpu_custom_call.1} parent=5 // pred_check
        %p293 = pneg %p292
      $region46: #{tpu_custom_call.1} parent=5 // pred_check_branch
        %295 = sbr.rel (%p293) target = $region48
      $region47: #{tpu_custom_call.1} parent=5 // pred_region
        // Predicated region
        $region49: #{tpu_custom_call.1} parent=47 // pred_check
          %p296 = pneg %p42
        $region50: #{tpu_custom_call.1} parent=47 // pred_check_branch
          %298 = sbr.rel (%p296) target = $region52
        $region51: #{tpu_custom_call.1} parent=47 // pred_region
          %s299 = sand.u32 %s32, 1
          %s300 = scalar_lea.sflag [#allocation3], %s299
          %s301 = sand.u32 %s32, 1
          %s302 = smul.addr %s301, 16
          %s303 = scalar_lea.vmem [#allocation2], %s302
          %305 = vsyncadd %s300, 0
          %s306 = smul.addr %s22, 2
          %s307 = smul.addr %s306, 8
          %s308 = scalar_lea.hbm %s0, %s307
          %s310 = sshll.u32 %s308, 4
          %s311 = int_to_ptr.hbm [resolvable:$true] %s310
          %s312 = sshll.u32 %s303, 4
          %s313 = int_to_ptr.vmem [resolvable:$true] %s312
          %315 = dma.hbm_to_vmem [thread:$0]  %s311, 256, %s313, %s300
        $region52: #{tpu_custom_call.1} parent=47 // pred_fallthru
          _
      $region48: #{tpu_custom_call.1} parent=5 // pred_fallthru
        _
      %p316 = scmp.le.s32.totalorder 1, %s22
      %p317 = scmp.lt.s32.totalorder %s22, 3
      %p318 = pnand %p316, %p317
      %p319 = pneg %p318
      // Predicated region
      $region53: #{tpu_custom_call.1} parent=5 // pred_check
        _
      $region54: #{tpu_custom_call.1} parent=5 // pred_check_branch
        %321 = sbr.rel (%p318) target = $region56
      $region55: #{tpu_custom_call.1} parent=5 // pred_region
        %s322 = ssub.s32 %s22, 1
        %s323 = sand.u32 %s35, 1
        %s324 = scalar_lea.sflag [#allocation3], %s323
        %s325 = sand.u32 %s35, 1
        %s326 = smul.addr %s325, 16
        %s327 = scalar_lea.vmem [#allocation2], %s326
        // Predicated region
        $region57: #{tpu_custom_call.1} parent=55 // pred_check
          %p328 = pneg %p48
        $region58: #{tpu_custom_call.1} parent=55 // pred_check_branch
          %330 = sbr.rel (%p328) target = $region60
        $region59: #{tpu_custom_call.1} parent=55 // pred_region
          %332 = dma.done %s324, 256
        $region60: #{tpu_custom_call.1} parent=55 // pred_fallthru
          _
        // Predicated region
        $region61: #{tpu_custom_call.1} parent=55 // pred_check
          %p333 = pneg %p216
        $region62: #{tpu_custom_call.1} parent=55 // pred_check_branch
          %335 = sbr.rel (%p333) target = $region64
        $region63: #{tpu_custom_call.1} parent=55 // pred_region
          %337 = dma.done [#allocation6], 512
        $region64: #{tpu_custom_call.1} parent=55 // pred_fallthru
          _
        %s338 = sand.u32 %s35, 1
        %s339 = scalar_lea.sflag [#allocation3], %s338
        %s340 = sand.u32 %s35, 1
        %s341 = smul.addr %s340, 16
        %s342 = scalar_lea.vmem [#allocation2], %s341
        %p343 = pneg %p48
        %p344 = pneg %p45
        %p345 = pneg %p69
        %p346 = pneg %p66
        %p347 = pneg %p90
        %p348 = pneg %p87
        %p349 = pneg %p111
        %p350 = pneg %p108
        %p351 = pneg %p132
        %p352 = pneg %p129
        %p353 = pneg %p153
        %p354 = pneg %p150
        %p355 = pneg %p174
        %p356 = pneg %p171
        %p357 = pneg %p195
        %p358 = pneg %p192
        %p359 = pneg %p216
        %p360 = pneg %p213
        %p361 = pneg %p242
        %p362 = pneg %p239
        %s363 = sand.u32 %s229, 1
        %s364 = scalar_lea.sflag [#allocation4], %s363
        %s365 = sand.u32 %s229, 1
        %s366 = smul.addr %s365, 8
        %s367 = scalar_lea.vmem [#allocation7], %s366
        %v369 = vld [vmem:[%s327] sm:$0xff]
        %v370 = vld [vmem:[%s327 + $0x8] sm:$0xff]
        %v371 = vld [vmem:[%s1] sm:$0xff]
        %373 = vset.pattern.permute.xlu0 0
        %374 = vperm.xlu0 %373, %v371
        %v375 = vpop.permute.xlu0 %374
        %v377 = vmul.f32 %v369, %v375
        %v378 = vmul.f32 %v370, %v375
        %v379 = vld [vmem:[%s2] sm:$0xff]
        %381 = vset.pattern.permute.xlu0 0
        %382 = vperm.xlu0 %381, %v379
        %v383 = vpop.permute.xlu0 %382
        %v385 = vadd.f32 %v377, %v383
        %v386 = vadd.f32 %v378, %v383
        %v387 = vmax.f32 %v385, 0.0
        %v388 = vmax.f32 %v386, 0.0
        %v389 = vld [vmem:[%s3] sm:$0x1]
        %v390 = vpack.c.bf16 %v387, %v387
        %v391 = vpack.c.bf16 %v388, %v388
        %v392 = vld [vmem:[%s4] sm:$0x3]
        %394 = vset.pattern.permute.xlu0 0
        %395 = vperm.xlu0 %394, %v392
        %v396 = vpop.permute.xlu0 %395
        %vm398 = vcmask 64512
        %v400 = vsel %vm398, %v389, 0
        %vm402 = vcmask 1043456
        %v404 = vsel %vm402, %v390, 0
        %v407 = vsel %vm402, %v391, 0
        %409 = vmatpush.bf16.msra.mxu0 0
        %410 = vmatpush.bf16.msra.mxu0 0
        %411 = vmatpush.bf16.msra.mxu0 0
        %412 = vmatpush.bf16.msra.mxu0 0
        %413 = vmatpush.bf16.msra.mxu0 0
        %414 = vmatpush.bf16.msra.mxu0 0
        %415 = vmatpush.bf16.msra.mxu0 0
        %416 = vmatpush.bf16.msra.mxu0 %v404
        %417 = vmatmul.bf16.gmra.mxu0 %v400
        %v418 = vpop.f32.mrf.mxu0
        %v419 = vadd.f32 %v396, %v418
        %v420 = vpop.f32.mrf.mxu0
        %421 = vdwg.mxu0
        %422 = vmatpush.bf16.msra.mxu0 0
        %423 = vmatpush.bf16.msra.mxu0 0
        %424 = vmatpush.bf16.msra.mxu0 0
        %425 = vmatpush.bf16.msra.mxu0 0
        %426 = vmatpush.bf16.msra.mxu0 0
        %427 = vmatpush.bf16.msra.mxu0 0
        %428 = vmatpush.bf16.msra.mxu0 0
        %429 = vmatpush.bf16.msra.mxu0 %v407
        %430 = vmatmul.bf16.gmra.mxu0 %v400
        %v431 = vpop.f32.mrf.mxu0
        %v432 = vadd.f32 %v396, %v431
        %v433 = vpop.f32.mrf.mxu0
        %434 = vdwg.mxu0
        %v435 = vmax.f32 %v419, 0.0
        %v436 = vmax.f32 %v432, 0.0
        %v437 = vld [vmem:[#allocation5] ss:$8 sm:$0x3]
        %v439 = vperm.slane %v437, 0
        %v440 = vperm.slane %v437, 1
        %441 = vrot.lane.b32.xlu0 %v439, 111
        %v442 = vpop.permute.xlu0 %441
        %443 = vrot.lane.b32.xlu0 %v440, 111
        %v444 = vpop.permute.xlu0 %443
        %vm445 = vcmask 908288
        %v446 = vsel %vm445, %v442, %v444
        %v450 = vmul.f32 %v436, %v442
        %v451 = vmul.f32 %v435, %v446
        %v452 = vmul.f32 %v436, %v444
        %s453 = scalar_lea.vmem [#allocation5], 1
        %v454 = vld [vmem:[%s453] ss:$8 sm:$0x3]
        %v456 = vperm.slane %v454, 0
        %v457 = vperm.slane %v454, 1
        %458 = vrot.lane.b32.xlu0 %v456, 112
        %v459 = vpop.permute.xlu0 %458
        %460 = vrot.lane.b32.xlu0 %v457, 112
        %v461 = vpop.permute.xlu0 %460
        %vm462 = vcmask 916480
        %v463 = vsel %vm462, %v459, %v461
        %v467 = vmul.f32 %v436, %v459
        %v468 = vmul.f32 %v435, %v463
        %v469 = vmul.f32 %v436, %v461
        %s470 = scalar_lea.vmem [#allocation5], 2
        %v471 = vld [vmem:[%s470] ss:$8 sm:$0x3]
        %v473 = vperm.slane %v471, 0
        %v474 = vperm.slane %v471, 1
        %475 = vrot.lane.b32.xlu0 %v473, 113
        %v476 = vpop.permute.xlu0 %475
        %477 = vrot.lane.b32.xlu0 %v474, 113
        %v478 = vpop.permute.xlu0 %477
        %vm479 = vcmask 924672
        %v480 = vsel %vm479, %v476, %v478
        %v484 = vmul.f32 %v436, %v476
        %v485 = vmul.f32 %v435, %v480
        %v486 = vmul.f32 %v436, %v478
        %s487 = scalar_lea.vmem [#allocation5], 3
        %v488 = vld [vmem:[%s487] ss:$8 sm:$0x3]
        %v490 = vperm.slane %v488, 0
        %v491 = vperm.slane %v488, 1
        %492 = vrot.lane.b32.xlu0 %v490, 127
        %v493 = vpop.permute.xlu0 %492
        %494 = vrot.lane.b32.xlu0 %v491, 127
        %v495 = vpop.permute.xlu0 %494
        %vm496 = vcmask 1039360
        %v497 = vsel %vm496, %v493, %v495
        %v501 = vmul.f32 %v436, %v493
        %v502 = vmul.f32 %v435, %v497
        %v503 = vmul.f32 %v436, %v495
        %s504 = scalar_lea.vmem [#allocation5], 5
        %v505 = vld [vmem:[%s504] ss:$8 sm:$0x3]
        %v507 = vperm.slane %v505, 0
        %v508 = vperm.slane %v505, 1
        %509 = vrot.lane.b32.xlu0 %v507, 1
        %v510 = vpop.permute.xlu0 %509
        %511 = vrot.lane.b32.xlu0 %v508, 1
        %v512 = vpop.permute.xlu0 %511
        %vm513 = vcmask 7168
        %v514 = vsel %vm513, %v510, %v512
        %v518 = vmul.f32 %v435, %v510
        %v519 = vmul.f32 %v436, %v514
        %v520 = vmul.f32 %v435, %v512
        %s521 = scalar_lea.vmem [#allocation5], 6
        %v522 = vld [vmem:[%s521] ss:$8 sm:$0x3]
        %v524 = vperm.slane %v522, 0
        %v525 = vperm.slane %v522, 1
        %526 = vrot.lane.b32.xlu0 %v524, 15
        %v527 = vpop.permute.xlu0 %526
        %528 = vrot.lane.b32.xlu0 %v525, 15
        %v529 = vpop.permute.xlu0 %528
        %vm530 = vcmask 121856
        %v531 = vsel %vm530, %v527, %v529
        %v535 = vmul.f32 %v435, %v527
        %v536 = vmul.f32 %v436, %v531
        %v537 = vmul.f32 %v435, %v529
        %s538 = scalar_lea.vmem [#allocation5], 7
        %v539 = vld [vmem:[%s538] ss:$8 sm:$0x3]
        %v541 = vperm.slane %v539, 0
        %v542 = vperm.slane %v539, 1
        %543 = vrot.lane.b32.xlu0 %v541, 16
        %v544 = vpop.permute.xlu0 %543
        %545 = vrot.lane.b32.xlu0 %v542, 16
        %v546 = vpop.permute.xlu0 %545
        %vm547 = vcmask 130048
        %v548 = vsel %vm547, %v544, %v546
        %v552 = vmul.f32 %v435, %v544
        %v553 = vmul.f32 %v436, %v548
        %v554 = vmul.f32 %v435, %v546
        %s555 = scalar_lea.vmem [#allocation5], 16
        %v556 = vld [vmem:[%s555] ss:$8 sm:$0x3]
        %v558 = vperm.slane %v556, 0
        %v559 = vperm.slane %v556, 1
        %560 = vrot.lane.b32.xlu0 %v558, 17
        %v561 = vpop.permute.xlu0 %560
        %562 = vrot.lane.b32.xlu0 %v559, 17
        %v563 = vpop.permute.xlu0 %562
        %vm564 = vcmask 138240
        %v565 = vsel %vm564, %v561, %v563
        %v569 = vmul.f32 %v435, %v561
        %v570 = vmul.f32 %v436, %v565
        %v571 = vmul.f32 %v435, %v563
        %v575 = vrot.slane %v467, 6
        %v576 = vrot.slane %v468, 6
        %v577 = vrot.slane %v469, 6
        %578 = vrot.lane.b32.xlu0 %v575, 127
        %v579 = vpop.permute.xlu0 %578
        %580 = vrot.lane.b32.xlu0 %v576, 127
        %v581 = vpop.permute.xlu0 %580
        %582 = vrot.lane.b32.xlu0 %v577, 127
        %v583 = vpop.permute.xlu0 %582
        %v584 = vsel %vm496, %v579, %v581
        %v585 = vsel %vm496, %v581, %v583
        %v592 = vrot.slane %v484, 4
        %v593 = vrot.slane %v485, 4
        %v594 = vrot.slane %v486, 4
        %595 = vrot.lane.b32.xlu0 %v592, 126
        %v596 = vpop.permute.xlu0 %595
        %597 = vrot.lane.b32.xlu0 %v593, 126
        %v598 = vpop.permute.xlu0 %597
        %599 = vrot.lane.b32.xlu0 %v594, 126
        %v600 = vpop.permute.xlu0 %599
        %vm601 = vcmask 1031168
        %v602 = vsel %vm601, %v596, %v598
        %v603 = vsel %vm601, %v598, %v600
        %v610 = vrot.slane %v501, 2
        %v611 = vrot.slane %v502, 2
        %v612 = vrot.slane %v503, 2
        %613 = vrot.lane.b32.xlu0 %v610, 112
        %v614 = vpop.permute.xlu0 %613
        %615 = vrot.lane.b32.xlu0 %v611, 112
        %v616 = vpop.permute.xlu0 %615
        %617 = vrot.lane.b32.xlu0 %v612, 112
        %v618 = vpop.permute.xlu0 %617
        %v619 = vsel %vm462, %v614, %v616
        %v620 = vsel %vm462, %v616, %v618
        %626 = vrot.lane.b32.xlu0 %v435, 111
        %v627 = vpop.permute.xlu0 %626
        %628 = vrot.lane.b32.xlu0 %v436, 111
        %v629 = vpop.permute.xlu0 %628
        %v630 = vsel %vm445, %v627, %v629
        %v637 = vrot.slane %v518, 6
        %v638 = vrot.slane %v519, 6
        %v639 = vrot.slane %v520, 6
        %640 = vrot.lane.b32.xlu0 %v637, 110
        %v641 = vpop.permute.xlu0 %640
        %642 = vrot.lane.b32.xlu0 %v638, 110
        %v643 = vpop.permute.xlu0 %642
        %644 = vrot.lane.b32.xlu0 %v639, 110
        %v645 = vpop.permute.xlu0 %644
        %vm646 = vcmask 900096
        %v647 = vsel %vm646, %v641, %v643
        %v648 = vsel %vm646, %v643, %v645
        %v655 = vrot.slane %v535, 4
        %v656 = vrot.slane %v536, 4
        %v657 = vrot.slane %v537, 4
        %658 = vrot.lane.b32.xlu0 %v655, 96
        %v659 = vpop.permute.xlu0 %658
        %660 = vrot.lane.b32.xlu0 %v656, 96
        %v661 = vpop.permute.xlu0 %660
        %662 = vrot.lane.b32.xlu0 %v657, 96
        %v663 = vpop.permute.xlu0 %662
        %vm664 = vcmask 785408
        %v665 = vsel %vm664, %v659, %v661
        %v666 = vsel %vm664, %v661, %v663
        %v673 = vrot.slane %v552, 2
        %v674 = vrot.slane %v553, 2
        %v675 = vrot.slane %v554, 2
        %676 = vrot.lane.b32.xlu0 %v673, 95
        %v677 = vpop.permute.xlu0 %676
        %678 = vrot.lane.b32.xlu0 %v674, 95
        %v679 = vpop.permute.xlu0 %678
        %680 = vrot.lane.b32.xlu0 %v675, 95
        %v681 = vpop.permute.xlu0 %680
        %vm682 = vcmask 777216
        %v683 = vsel %vm682, %v677, %v679
        %v684 = vsel %vm682, %v679, %v681
        %691 = vrot.lane.b32.xlu0 %v569, 94
        %v692 = vpop.permute.xlu0 %691
        %693 = vrot.lane.b32.xlu0 %v570, 94
        %v694 = vpop.permute.xlu0 %693
        %695 = vrot.lane.b32.xlu0 %v571, 94
        %v696 = vpop.permute.xlu0 %695
        %vm697 = vcmask 769024
        %v698 = vsel %vm697, %v692, %v694
        %v699 = vsel %vm697, %v694, %v696
        %vm703 = vcmask 1041408
        %v704 = vsel %vm703, %v450, %v584
        %v705 = vsel %vm703, %v451, %v585
        %v706 = vsel %vm703, %v452, %v583
        %v707 = vsel %vm402, %v704, %v602
        %v708 = vsel %vm402, %v705, %v603
        %v709 = vsel %vm402, %v706, %v600
        %vm710 = vcmask 1045504
        %v711 = vsel %vm710, %v707, %v619
        %v712 = vsel %vm710, %v708, %v620
        %v713 = vsel %vm710, %v709, %v618
        %v714 = vsel %vm703, %v627, %v641
        %v715 = vsel %vm703, %v630, %v647
        %v716 = vsel %vm703, %v629, %v648
        %v717 = vsel %vm402, %v714, %v659
        %v718 = vsel %vm402, %v715, %v665
        %v719 = vsel %vm402, %v716, %v666
        %v720 = vsel %vm710, %v717, %v677
        %v721 = vsel %vm710, %v718, %v683
        %v722 = vsel %vm710, %v719, %v684
        %v723 = vld [vmem:[%s5] sm:$0x1]
        %v724 = vpack.c.bf16 %v720, %v711
        %v725 = vpack.c.bf16 %v721, %v712
        %v726 = vpack.c.bf16 %v722, %v713
        %v727 = vpack.c.bf16 %v692, %v692
        %v728 = vpack.c.bf16 %v698, %v698
        %v729 = vpack.c.bf16 %v699, %v699
        %v730 = vld [vmem:[%s6] sm:$0x3]
        %732 = vset.pattern.permute.xlu0 0
        %733 = vperm.xlu0 %732, %v730
        %v734 = vpop.permute.xlu0 %733
        %742 = vrot.lane.b32.xlu0 %v724, 17
        %v743 = vpop.permute.xlu0 %742
        %744 = vrot.lane.b32.xlu0 %v725, 17
        %v745 = vpop.permute.xlu0 %744
        %746 = vrot.lane.b32.xlu0 %v726, 17
        %v747 = vpop.permute.xlu0 %746
        %748 = vrot.lane.b32.xlu0 %v727, 17
        %v749 = vpop.permute.xlu0 %748
        %750 = vrot.lane.b32.xlu0 %v728, 17
        %v751 = vpop.permute.xlu0 %750
        %752 = vrot.lane.b32.xlu0 %v729, 17
        %v753 = vpop.permute.xlu0 %752
        %vm754 = vcmask 138240
        %v755 = vsel %vm754, %v743, %v745
        %v756 = vsel %vm754, %v745, %v747
        %v757 = vsel %vm754, %v749, %v751
        %v758 = vsel %vm754, %v751, %v753
        %vm761 = vcmask 146432
        %v763 = vsel %vm761, %v723, 0
        %vm765 = vcmask 1040384
        %v767 = vsel %vm765, %v757, 0
        %v770 = vsel %vm765, %v758, 0
        %772 = vmatpush.bf16.msra.mxu0 0
        %773 = vmatpush.bf16.msra.mxu0 0
        %774 = vmatpush.bf16.msra.mxu0 0
        %775 = vmatpush.bf16.msra.mxu0 0
        %776 = vmatpush.bf16.msra.mxu0 0
        %777 = vmatpush.bf16.msra.mxu0 0
        %778 = vmatpush.bf16.msra.mxu0 %v767
        %779 = vmatpush.bf16.msra.mxu0 %v755
        %780 = vmatmul.bf16.gmra.mxu0 %v763
        %v781 = vpop.f32.mrf.mxu0
        %v782 = vadd.f32 %v734, %v781
        %v783 = vpop.f32.mrf.mxu0
        %784 = vdwg.mxu0
        %785 = vmatpush.bf16.msra.mxu0 0
        %786 = vmatpush.bf16.msra.mxu0 0
        %787 = vmatpush.bf16.msra.mxu0 0
        %788 = vmatpush.bf16.msra.mxu0 0
        %789 = vmatpush.bf16.msra.mxu0 0
        %790 = vmatpush.bf16.msra.mxu0 0
        %791 = vmatpush.bf16.msra.mxu0 %v770
        %792 = vmatpush.bf16.msra.mxu0 %v756
        %793 = vmatmul.bf16.gmra.mxu0 %v763
        %v794 = vpop.f32.mrf.mxu0
        %v795 = vadd.f32 %v734, %v794
        %v796 = vpop.f32.mrf.mxu0
        %797 = vdwg.mxu0
        %v798 = vmax.f32 %v782, 0.0
        %v799 = vmax.f32 %v795, 0.0
        %v802 = vrot.slane %v369, 6
        %v803 = vrot.slane %v370, 6
        %v806 = vsel %vm703, %v798, %v802
        %v807 = vsel %vm703, %v799, %v803
        %v808 = vld [vmem:[%s7] sm:$0xf]
        %vm809 = vcmask 80896
        %v811 = vsel %vm809, %v808, 0
        %v813 = vsel %vm703, %v802, 0
        %v815 = vsel %vm703, %v803, 0
        %817 = vmatpush.msra.mxu0 0.0
        %818 = vmatpush.msra.mxu0 0.0
        %819 = vmatpush.msra.mxu0 0.0
        %820 = vmatpush.msra.mxu0 0.0
        %821 = vmatpush.msra.mxu0 0.0
        %822 = vmatpush.msra.mxu0 0.0
        %823 = vmatpush.msra.mxu0 0.0
        %824 = vmatpush.msra.mxu0 0.0
        %825 = vmatpush.msra.mxu0 0.0
        %826 = vmatpush.msra.mxu0 0.0
        %827 = vmatpush.msra.mxu0 0.0
        %828 = vmatpush.msra.mxu0 0.0
        %829 = vmatpush.msra.mxu0 0.0
        %830 = vmatpush.msra.mxu0 0.0
        %831 = vmatpush.msra.mxu0 %v813
        %832 = vmatpush.msra.mxu0 %v806
        %833 = vmatmul.f32.gmra.mxu0 %v811
        %v834 = vpop.f32.mrf.mxu0
        %v835 = vadd.f32 0.0, %v834
        %836 = vdwg.mxu0
        %837 = vmatpush.msra.mxu0 0.0
        %838 = vmatpush.msra.mxu0 0.0
        %839 = vmatpush.msra.mxu0 0.0
        %840 = vmatpush.msra.mxu0 0.0
        %841 = vmatpush.msra.mxu0 0.0
        %842 = vmatpush.msra.mxu0 0.0
        %843 = vmatpush.msra.mxu0 0.0
        %844 = vmatpush.msra.mxu0 0.0
        %845 = vmatpush.msra.mxu0 0.0
        %846 = vmatpush.msra.mxu0 0.0
        %847 = vmatpush.msra.mxu0 0.0
        %848 = vmatpush.msra.mxu0 0.0
        %849 = vmatpush.msra.mxu0 0.0
        %850 = vmatpush.msra.mxu0 0.0
        %851 = vmatpush.msra.mxu0 %v815
        %852 = vmatpush.msra.mxu0 %v807
        %853 = vmatmul.f32.gmra.mxu0 %v811
        %v854 = vpop.f32.mrf.mxu0
        %v855 = vadd.f32 0.0, %v854
        %856 = vdwg.mxu0
        %v859 = vrot.slane %v855, 4
        %v860 = vsel %vm402, %v835, %v859
        %862 = vst [vmem:[%s367] sm:$0xff] %v860
        %s863 = sand.u32 %s229, 1
        %s864 = scalar_lea.sflag [#allocation4], %s863
        %s865 = sand.u32 %s229, 1
        %s866 = smul.addr %s865, 8
        %s867 = scalar_lea.vmem [#allocation7], %s866
        // Predicated region
        $region65: #{tpu_custom_call.1} parent=55 // pred_check
          %p868 = pneg %p239
        $region66: #{tpu_custom_call.1} parent=55 // pred_check_branch
          %870 = sbr.rel (%p868) target = $region68
        $region67: #{tpu_custom_call.1} parent=55 // pred_region
          %872 = vsyncadd %s864, 0
          %s873 = smul.addr %s27, 2
          %s874 = smul.addr %s873, 4
          %s875 = scalar_lea.hbm %s9, %s874
          %s877 = sshll.u32 %s867, 4
          %s878 = int_to_ptr.vmem [resolvable:$true] %s877
          %s879 = sshll.u32 %s875, 4
          %s880 = int_to_ptr.hbm [resolvable:$true] %s879
          %882 = dma.vmem_to_hbm [thread:$0]  %s878, 128, %s880, %s864
        $region68: #{tpu_custom_call.1} parent=55 // pred_fallthru
          _
      $region56: #{tpu_custom_call.1} parent=5 // pred_fallthru
        _
      %p883 = scmp.le.s32.totalorder 2, %s22
      // Predicated region
      $region69: #{tpu_custom_call.1} parent=5 // pred_check
        %p884 = pneg %p883
      $region70: #{tpu_custom_call.1} parent=5 // pred_check_branch
        %886 = sbr.rel (%p884) target = $region72
      $region71: #{tpu_custom_call.1} parent=5 // pred_region
        %s887 = ssub.s32 %s22, 2
        // Predicated region
        $region73: #{tpu_custom_call.1} parent=71 // pred_check
          %p888 = pneg %p245
        $region74: #{tpu_custom_call.1} parent=71 // pred_check_branch
          %890 = sbr.rel (%p888) target = $region76
        $region75: #{tpu_custom_call.1} parent=71 // pred_region
          %s891 = sand.u32 %s230, 1
          %s892 = scalar_lea.sflag [#allocation4], %s891
          %s893 = sand.u32 %s230, 1
          %s894 = smul.addr %s893, 8
          %s895 = scalar_lea.vmem [#allocation7], %s894
          %897 = dma.done %s892, 128
        $region76: #{tpu_custom_call.1} parent=71 // pred_fallthru
          _
      $region72: #{tpu_custom_call.1} parent=5 // pred_fallthru
        _
    $region6: #{tpu_custom_call.1} parent=1 // loop_footer
      %s26 = sadd.s32 1, %s22
    $region7: #{tpu_custom_call.1} parent=1 // loop_footer_branch
      %21 = sbr.rel target = $region3
    $region8: #{tpu_custom_call.1} parent=1 // loop_exit
      _
    %898 = vsyncpa [#allocation3], 1
    %s899 = scalar_lea.sflag [#allocation3], 1
    %900 = vsyncpa %s899, 1
    %901 = vsyncpa [#allocation6], 1
    %902 = vsyncpa [#allocation4], 1
    %s903 = scalar_lea.sflag [#allocation4], 1
    %904 = vsyncpa %s903, 1

</llo_original>
